<compile_context>
chip_gen: v7x
topology: tpu7x:2x2x1
jax: 0.10.0
libtpu: 0.0.40
codegen_flags: <defaults>
</compile_context>

<pallas_src>
import math
from functools import lru_cache, partial
from typing import NamedTuple

import numpy as np
import jax
import jax.numpy as jnp
from jax.experimental import pallas as pl
from jax.experimental.pallas import tpu as pltpu


# ------------------------------ configuration ------------------------------

_STREAM_DTYPE = jnp.bfloat16       # dtype used to stream x / M^T into the MXU
_MAX_TK = 2048                     # contraction-axis tile (multiple of 128)
_MAX_TN = 1024                     # output-lane tile      (multiple of 128)
_MAX_TC = 2048                     # elementwise column tile
_MAX_TR = 256                      # elementwise row tile  (multiple of 8)
_VMEM_LIMIT = 64 * 1024 * 1024     # explicit scoped-VMEM cap for the matmuls


def _round_up(n, m):
    return ((n + m - 1) // m) * m


def _cdiv(a, b):
    return -(-a // b)


def _lane_tiles(n, max_tile, min_tiles=1):
    """Lane-style dim: align to 128, split into nj tiles of width tn."""
    n_al = _round_up(max(n, 1), 128)
    nj = _cdiv(n_al, max_tile)
    if n_al >= min_tiles * 128:
        nj = max(nj, min_tiles)
    tn = _round_up(_cdiv(n_al, nj), 128)
    return tn, nj, nj * tn


class _MMMeta(NamedTuple):
    tk: int        # contraction tile
    tn: int        # lane tile
    nj: int        # number of lane tiles
    nk_max: int    # max active K tiles per (face, lane-tile) group
    k_dim: int     # logical contraction length
    k_pad: int     # padded contraction length
    n_dim: int     # logical output-lane length
    n_pad: int     # padded output-lane length


# ----------------------------- Pallas kernels ------------------------------

def _e2c_kernel_f32(tab_ref, cnt_ref, x_ref, mt_ref, o_ref):
    # grid = (face, n_tile, k_tile); reduction over k only; f32 output block
    # stays resident across k so we accumulate into it directly.
    f, j, k = pl.program_id(0), pl.program_id(1), pl.program_id(2)
    nj = pl.num_programs(1)

    @pl.when(k == 0)
    def _init():
        o_ref[...] = jnp.zeros_like(o_ref)

    @pl.when(k < cnt_ref[f * nj + j])
    def _acc():
        o_ref[...] += jnp.dot(x_ref[...], mt_ref[...],
                              preferred_element_type=jnp.float32)


def _e2c_kernel_lowp(tab_ref, cnt_ref, x_ref, mt_ref, o_ref, acc_ref):
    f, j, k = pl.program_id(0), pl.program_id(1), pl.program_id(2)
    nj = pl.num_programs(1)

    @pl.when(k == 0)
    def _init():
        acc_ref[...] = jnp.zeros_like(acc_ref)

    @pl.when(k < cnt_ref[f * nj + j])
    def _acc():
        acc_ref[...] += jnp.dot(x_ref[...], mt_ref[...],
                                preferred_element_type=jnp.float32)

    @pl.when(k == pl.num_programs(2) - 1)
    def _flush():
        o_ref[...] = acc_ref[...].astype(o_ref.dtype)


def _c2e_kernel_f32(tab_ref, cnt_ref, x_ref, mt_ref, o_ref):
    # grid = (n_tile, face, k_tile); reduction over (face, k).
    j, f, k = pl.program_id(0), pl.program_id(1), pl.program_id(2)
    nf = pl.num_programs(1)

    @pl.when(jnp.logical_and(f == 0, k == 0))
    def _init():
        o_ref[...] = jnp.zeros_like(o_ref)

    @pl.when(k < cnt_ref[j * nf + f])
    def _acc():
        o_ref[...] += jnp.dot(x_ref[...], mt_ref[...],
                              preferred_element_type=jnp.float32)


def _c2e_kernel_lowp(tab_ref, cnt_ref, x_ref, mt_ref, o_ref, acc_ref):
    j, f, k = pl.program_id(0), pl.program_id(1), pl.program_id(2)
    nf = pl.num_programs(1)

    @pl.when(jnp.logical_and(f == 0, k == 0))
    def _init():
        acc_ref[...] = jnp.zeros_like(acc_ref)

    @pl.when(k < cnt_ref[j * nf + f])
    def _acc():
        acc_ref[...] += jnp.dot(x_ref[...], mt_ref[...],
                                preferred_element_type=jnp.float32)

    @pl.when(jnp.logical_and(f == pl.num_programs(1) - 1,
                             k == pl.num_programs(2) - 1))
    def _flush():
        o_ref[...] = acc_ref[...].astype(o_ref.dtype)


def _scale_kernel(x_ref, r_ref, o_ref):
    # Elementwise (VPU); math in f32 (v5e VPU has no bf16 path).
    o_ref[...] = (x_ref[...].astype(jnp.float32) * r_ref[...]).astype(o_ref.dtype)


# -------------------------- pallas_call wrappers ----------------------------

def _e2c_pallas(x2p, mt6, tab, cnt, meta, out_dtype):
    """x2p: (Rp, k_pad) stream-dtype, mt6: (6, k_pad, n_pad) stream-dtype
       -> (6, Rp, n_pad) out_dtype, streaming only the active K tiles."""
    Rp = x2p.shape[0]
    tk, tn, nj, nk_max, n_pad = meta.tk, meta.tn, meta.nj, meta.nk_max, meta.n_pad
    f32_out = np.dtype(out_dtype) == np.dtype(np.float32)
    kernel = _e2c_kernel_f32 if f32_out else _e2c_kernel_lowp
    scratch = () if f32_out else (pltpu.VMEM((Rp, tn), jnp.float32),)

    steps = 6 * nj * nk_max
    itm = jnp.dtype(_STREAM_DTYPE).itemsize
    ito = jnp.dtype(out_dtype).itemsize
    cost = pl.CostEstimate(
        flops=2 * steps * Rp * tk * tn,
        transcendentals=0,
        bytes_accessed=steps * (tk * tn + Rp * tk) * itm + 6 * Rp * n_pad * ito)

    x_map = lambda f, j, k, tab_r, cnt_r: (0, tab_r[(f * nj + j) * nk_max + k])
    mt_map = lambda f, j, k, tab_r, cnt_r: (f, tab_r[(f * nj + j) * nk_max + k], j)
    o_map = lambda f, j, k, tab_r, cnt_r: (f, 0, j)

    return pl.pallas_call(
        kernel,
        out_shape=jax.ShapeDtypeStruct((6, Rp, n_pad), out_dtype),
        grid_spec=pltpu.PrefetchScalarGridSpec(
            num_scalar_prefetch=2,
            grid=(6, nj, nk_max),
            in_specs=[
                pl.BlockSpec((Rp, tk), x_map),
                pl.BlockSpec((None, tk, tn), mt_map),
            ],
            out_specs=pl.BlockSpec((None, Rp, tn), o_map),
            scratch_shapes=scratch),
        compiler_params=pltpu.CompilerParams(
            dimension_semantics=("parallel", "parallel", "arbitrary"),
            vmem_limit_bytes=_VMEM_LIMIT),
        cost_estimate=cost,
    )(tab, cnt, x2p, mt6)


def _c2e_pallas(x3p, mt3, tab, cnt, meta, out_dtype):
    """x3p: (6, Rp, k_pad) stream-dtype, mt3: (6, k_pad, n_pad) stream-dtype
       -> (Rp, n_pad) out_dtype, streaming only the active K tiles."""
    Rp = x3p.shape[1]
    tk, tn, nj, nk_max, n_pad = meta.tk, meta.tn, meta.nj, meta.nk_max, meta.n_pad
    f32_out = np.dtype(out_dtype) == np.dtype(np.float32)
    kernel = _c2e_kernel_f32 if f32_out else _c2e_kernel_lowp
    scratch = () if f32_out else (pltpu.VMEM((Rp, tn), jnp.float32),)

    steps = nj * 6 * nk_max
    itm = jnp.dtype(_STREAM_DTYPE).itemsize
    ito = jnp.dtype(out_dtype).itemsize
    cost = pl.CostEstimate(
        flops=2 * steps * Rp * tk * tn,
        transcendentals=0,
        bytes_accessed=steps * (tk * tn + Rp * tk) * itm + Rp * n_pad * ito)

    x_map = lambda j, f, k, tab_r, cnt_r: (f, 0, tab_r[(j * 6 + f) * nk_max + k])
    mt_map = lambda j, f, k, tab_r, cnt_r: (f, tab_r[(j * 6 + f) * nk_max + k], j)
    o_map = lambda j, f, k, tab_r, cnt_r: (0, j)

    return pl.pallas_call(
        kernel,
        out_shape=jax.ShapeDtypeStruct((Rp, n_pad), out_dtype),
        grid_spec=pltpu.PrefetchScalarGridSpec(
            num_scalar_prefetch=2,
            grid=(nj, 6, nk_max),
            in_specs=[
                pl.BlockSpec((None, Rp, tk), x_map),
                pl.BlockSpec((None, tk, tn), mt_map),
            ],
            out_specs=pl.BlockSpec((Rp, tn), o_map),
            scratch_shapes=scratch),
        compiler_params=pltpu.CompilerParams(
            dimension_semantics=("parallel", "arbitrary", "arbitrary"),
            vmem_limit_bytes=_VMEM_LIMIT),
        cost_estimate=cost,
    )(tab, cnt, x3p, mt3)


# --------------------- host-side (glue) precomputation ---------------------

def _bilinear_matrix(grid, in_h, in_w):
    """Dense matrix M (H_out*W_out, in_h*in_w) reproducing F.grid_sample
    (mode='bilinear', align_corners=True, padding_mode='zeros')."""
    Hout, Wout = grid.shape[:2]
    gx = grid[..., 0].reshape(-1).astype(np.float64)
    gy = grid[..., 1].reshape(-1).astype(np.float64)
    ix = (gx + 1.0) * 0.5 * (in_w - 1)
    iy = (gy + 1.0) * 0.5 * (in_h - 1)
    x0 = np.floor(ix); x1 = x0 + 1
    y0 = np.floor(iy); y1 = y0 + 1
    wx1 = ix - x0; wx0 = 1.0 - wx1
    wy1 = iy - y0; wy0 = 1.0 - wy1
    P_out, P_in = Hout * Wout, in_h * in_w
    M = np.zeros((P_out, P_in), np.float64)
    rows = np.arange(P_out)
    for xc, yc, w in ((x0, y0, wx0 * wy0), (x1, y0, wx1 * wy0),
                      (x0, y1, wx0 * wy1), (x1, y1, wx1 * wy1)):
        valid = (xc >= 0) & (xc <= in_w - 1) & (yc >= 0) & (yc <= in_h - 1)
        xi = np.clip(xc, 0, in_w - 1).astype(np.int64)
        yi = np.clip(yc, 0, in_h - 1).astype(np.int64)
        np.add.at(M, (rows, yi * in_w + xi), w * valid)
    return M.astype(np.float32)


def _rot_y(t):
    c, s = np.cos(t), np.sin(t)
    return np.array([[c, 0, s], [0, 1, 0], [-s, 0, c]], np.float32)


def _rot_x(p):
    c, s = np.cos(p), np.sin(p)
    return np.array([[1, 0, 0], [0, c, -s], [0, s, c]], np.float32)


def _equirec2cube_grids(equ_h, equ_w, out_dim, FOV=90):
    RADIUS = int(0.5 * out_dim)
    theta_lst = np.array([-90, 0, 90, 180], np.float32) / 180 * np.pi
    phi_lst = np.array([90, -90], np.float32) / 180 * np.pi
    R_lst = [_rot_y(t) for t in theta_lst] + [_rot_x(p) for p in phi_lst]
    c_x = (out_dim - 1) / 2.0
    c_y = (out_dim - 1) / 2.0
    wangle = (180 - FOV) / 2.0
    w_len = 2 * RADIUS * np.sin(np.radians(FOV / 2.0)) / np.sin(np.radians(wangle))
    interval = w_len / (out_dim - 1)
    z_map = np.zeros([out_dim, out_dim], np.float32) + RADIUS
    x_map = np.tile((np.arange(out_dim) - c_x) * interval, [out_dim, 1])
    y_map = np.tile((np.arange(out_dim) - c_y) * interval, [out_dim, 1]).T
    D = np.sqrt(x_map ** 2 + y_map ** 2 + z_map ** 2)
    xyz = np.zeros([out_dim, out_dim, 3], np.float32)
    xyz[:, :, 0] = RADIUS / D * x_map
    xyz[:, :, 1] = RADIUS / D * y_map
    xyz[:, :, 2] = RADIUS / D * z_map
    reshape_xyz = xyz.reshape(out_dim * out_dim, 3).T           # (3, d*d)
    locs = []
    for R in R_lst:
        result = (R @ reshape_xyz).T                            # (d*d, 3)
        lon = np.arctan2(result[:, 0], result[:, 2]).reshape(out_dim, out_dim) / np.pi
        lat = np.arcsin(result[:, 1] / RADIUS).reshape(out_dim, out_dim) / (np.pi / 2)
        locs.append(np.stack([lon, lat], -1).astype(np.float32))  # x=lon, y=lat
    new_lst = [3, 5, 1, 0, 2, 4]
    return [locs[i] for i in new_lst]


def _cube2equirec_grids(cube_size, output_h, output_w):
    radius = int(0.5 * cube_size)
    theta_range = (math.pi - math.pi / output_w) - (2 * math.pi / output_w) * np.arange(output_w)
    phi_range = (0.5 * math.pi - 0.5 * math.pi / output_h) - (math.pi / output_h) * np.arange(output_h)
    theta_map = np.tile(theta_range[None, :], (output_h, 1)).astype(np.float32)
    phi_map = np.tile(phi_range[:, None], (1, output_w)).astype(np.float32)
    x3 = radius * np.cos(phi_map) * np.sin(theta_map)
    y3 = radius * np.sin(phi_map)
    z3 = radius * np.cos(phi_map) * np.cos(theta_map)
    ball = np.stack([x3, y3, z3], -1)

    def face(ratio_comp, w_sel, w_sign, h_sel, h_sign, axis_sel, axis_val, use_round):
        ratio = np.abs(ratio_comp / radius)[..., None]
        raw = ball / ratio
        gw = w_sign * raw[..., w_sel] / radius
        gh = h_sign * raw[..., h_sel] / radius
        grid = np.stack([gw, gh], -1)
        comp = np.round(raw[..., axis_sel]) if use_round else raw[..., axis_sel]
        mask = ((gw <= 1) & (gw >= -1) & (gh <= 1) & (gh >= -1) & (comp == axis_val))
        return grid.astype(np.float32), mask.astype(np.float32)[..., None]

    g_back,  m_back  = face(z3, 0, +1, 1, -1, 2, -radius, True)
    g_down,  m_down  = face(y3, 0, -1, 2, -1, 1, -radius, False)
    g_front, m_front = face(z3, 0, -1, 1, -1, 2, +radius, True)
    g_left,  m_left  = face(x3, 2, +1, 1, -1, 0, +radius, True)
    g_right, m_right = face(x3, 2, -1, 1, -1, 0, -radius, True)
    g_up,    m_up    = face(y3, 0, -1, 2, +1, 1, +radius, False)

    grids = np.stack([g_back, g_down, g_front, g_left, g_right, g_up], 0)
    omask = (m_back * 0 + m_down * 1 + m_front * 2
             + m_left * 3 + m_right * 4 + m_up * 5)
    return grids, omask


def _ktile_tables(Mt, tk, tn, nk, nj, group_order):
    """Per-(face, lane-tile) active contraction-tile table.

    Mt: (6, nk*tk, nj*tn) f32.  Returns (tab, cnt, nk_max) where tab is a flat
    int32 table of length 6*nj*nk_max; padded entries repeat the last active
    tile so the Pallas pipeline de-dups the DMA while the compute is gated off
    by cnt.  group_order is 'fj' (e2c grid) or 'jf' (c2e grid)."""
    nz = (Mt != 0.0).reshape(6, nk, tk, nj, tn).any(axis=(2, 4))   # (6, nk, nj)
    acts, nk_max = {}, 1
    for f in range(6):
        for j in range(nj):
            a = np.nonzero(nz[f, :, j])[0].astype(np.int32)
            acts[(f, j)] = a
            nk_max = max(nk_max, len(a))
    tab = np.zeros((6 * nj * nk_max,), np.int32)
    cnt = np.zeros((6 * nj,), np.int32)
    for f in range(6):
        for j in range(nj):
            g = f * nj + j if group_order == 'fj' else j * 6 + f
            a = acts[(f, j)]
            cnt[g] = len(a)
            tab[g * nk_max: g * nk_max + len(a)] = a
            fill = a[-1] if len(a) else 0
            tab[g * nk_max + len(a): (g + 1) * nk_max] = fill
    return tab, cnt, nk_max


@lru_cache(maxsize=None)
def _e2c_setup(equ_h, equ_w, out_dim):
    """Weights (6, k_pad, n_pad), K-tile table/count, meta."""
    pin, dd = equ_h * equ_w, out_dim * out_dim
    tn, nj, n_pad = _lane_tiles(dd, _MAX_TN, min_tiles=1)
    k_al = _round_up(pin, 128)
    tk = min(_MAX_TK, k_al)
    nk = _cdiv(k_al, tk)
    k_pad = nk * tk
    locs = _equirec2cube_grids(equ_h, equ_w, out_dim)            # 6 x (d,d,2)
    Mt = np.zeros((6, k_pad, n_pad), np.float32)
    for f, g in enumerate(locs):
        Mt[f, :pin, :dd] = _bilinear_matrix(g, equ_h, equ_w).T   # (pin, dd)
    tab, cnt, nk_max = _ktile_tables(Mt, tk, tn, nk, nj, 'fj')
    meta = _MMMeta(tk, tn, nj, nk_max, pin, k_pad, dd, n_pad)
    return (jnp.asarray(Mt).astype(_STREAM_DTYPE),
            jnp.asarray(tab), jnp.asarray(cnt), meta)


@lru_cache(maxsize=None)
def _c2e_setup(cube_size, out_h, out_w):
    """Masked per-face weights (6, k_pad, n_pad), K-tile table/count, meta."""
    dd, pout = cube_size * cube_size, out_h * out_w
    # >= 2 lane tiles whenever possible so the v7x megacore has parallel work.
    tn, nj, n_pad = _lane_tiles(pout, _MAX_TN, min_tiles=2)
    k_al = _round_up(dd, 128)
    tk = min(_MAX_TK, k_al)
    nk = _cdiv(k_al, tk)
    k_pad = nk * tk
    grids, omask = _cube2equirec_grids(cube_size, out_h, out_w)
    Mt = np.zeros((6, k_pad, n_pad), np.float32)
    for ori in range(6):
        mask = (omask[..., 0] == ori).astype(np.float32)         # (H, W)
        masked_grid = np.nan_to_num(grids[ori] * mask[..., None])
        m = _bilinear_matrix(masked_grid, cube_size, cube_size)  # (pout, dd)
        m = m * mask.reshape(-1, 1)                              # post-sample mask
        Mt[ori, :dd, :pout] = m.T                                # (dd, pout)
    tab, cnt, nk_max = _ktile_tables(Mt, tk, tn, nk, nj, 'jf')
    meta = _MMMeta(tk, tn, nj, nk_max, dd, k_pad, pout, n_pad)
    return (jnp.asarray(Mt).astype(_STREAM_DTYPE),
            jnp.asarray(tab), jnp.asarray(cnt), meta)


@lru_cache(maxsize=None)
def _depth2radius_rate(w):
    f = w / 2
    y, x = np.meshgrid(np.arange(w), np.arange(w), indexing='ij')
    x = x - (w - 1) / 2
    y = y - (w - 1) / 2
    return jnp.asarray((np.sqrt(x ** 2 + y ** 2 + f ** 2) / f).astype(np.float32))


@lru_cache(maxsize=None)
def _radius2depth_rate(w):
    f = w / 2
    y, x = np.meshgrid(np.arange(w), np.arange(w), indexing='ij')
    x = x - (w - 1) / 2
    y = y - (w - 1) / 2
    return jnp.asarray((f / np.sqrt(x ** 2 + y ** 2 + f ** 2)).astype(np.float32))


# ------------------------------ jitted wrappers ------------------------------

@partial(jax.jit, static_argnames=("meta", "d"))
def _e2c_jit(x, mt6, tab, cnt, *, meta, d):
    B, C, H, W = x.shape
    R = B * C
    Rp = _round_up(R, 16)                       # bf16 sublane-pack friendly
    x2 = x.reshape(R, meta.k_dim).astype(_STREAM_DTYPE)
    # Zero-pad (not ragged-read) so padded K columns multiply real zeros.
    x2p = jnp.pad(x2, ((0, Rp - R), (0, meta.k_pad - meta.k_dim)))
    y3 = _e2c_pallas(x2p, mt6, tab, cnt, meta, x.dtype)          # (6, Rp, n_pad)
    y = y3[:, :R, :meta.n_dim].reshape(6, B, C, d, d)
    # For B == 1 this transpose is a pure reshape (no HBM pass).
    return jnp.transpose(y, (1, 0, 2, 3, 4)).reshape(B * 6, C, d, d)


@partial(jax.jit, static_argnames=("meta", "h", "w"))
def _c2e_jit(x, mt3, tab, cnt, *, meta, h, w):
    B, C = x.shape[0] // 6, x.shape[1]
    R = B * C
    Rp = _round_up(R, 16)
    dd = meta.k_dim
    # (B*6, C, d, d) -> (6, B*C, d*d); for B == 1 the transpose is a reshape.
    x3 = jnp.transpose(x.reshape(B, 6, C, dd), (1, 0, 2, 3)).reshape(6, R, dd)
    x3 = x3.astype(_STREAM_DTYPE)
    x3p = jnp.pad(x3, ((0, 0), (0, Rp - R), (0, meta.k_pad - dd)))
    y2 = _c2e_pallas(x3p, mt3, tab, cnt, meta, x.dtype)          # (Rp, n_pad)
    return y2[:R, :meta.n_dim].reshape(B, C, h, w)


@jax.jit
def _apply_rate_jit(x, rate_hw):
    # Un-padded elementwise kernel: ragged edge blocks handled by Pallas,
    # column-outer grid keeps the rate row resident across row tiles.
    H, W = x.shape[-2], x.shape[-1]
    P = H * W
    lead = x.shape[:-2]
    R = int(np.prod(lead)) if lead else 1
    x2 = x.reshape(R, P)
    r2 = rate_hw.reshape(1, P).astype(jnp.float32)
    tr = R if R <= _MAX_TR else _MAX_TR         # full dim or multiple of 8
    tc = P if P <= _MAX_TC else _MAX_TC         # full dim or multiple of 128
    y = pl.pallas_call(
        _scale_kernel,
        out_shape=jax.ShapeDtypeStruct((R, P), x.dtype),
        grid=(pl.cdiv(P, tc), pl.cdiv(R, tr)),
        in_specs=[pl.BlockSpec((tr, tc), lambda j, i: (i, j)),
                  pl.BlockSpec((1, tc), lambda j, i: (0, j))],
        out_specs=pl.BlockSpec((tr, tc), lambda j, i: (i, j)),
        compiler_params=pltpu.CompilerParams(
            dimension_semantics=("parallel", "parallel")),
    )(x2, r2)
    return y.reshape(x.shape)


# ------------------------------- CETransform --------------------------------

class CETransform:
    """JAX/Pallas re-implementation of models.geometry.imaging.CETransform."""

    def __call__(self, x, mode, s=2):
        return self.forward(x, mode, s)

    def forward(self, x, mode, s=2):
        assert mode in ['e2c', 'c2e', 'r2d', 'd2r']
        if mode in ['e2c', 'r2d']:
            h, w = x.shape[-2], x.shape[-1]
            d = h // s
        else:
            d = x.shape[-1]
            h = d * s
            w = h // 2
        if mode == 'e2c':
            mt6, tab, cnt, meta = _e2c_setup(h, w, d)
            return _e2c_jit(x, mt6, tab, cnt, meta=meta, d=d)
        if mode == 'c2e':
            if x.shape[0] % 6 != 0:
                raise ValueError('Batch size should be 6x')
            mt3, tab, cnt, meta = _c2e_setup(d, h, w)
            return _c2e_jit(x, mt3, tab, cnt, meta=meta, h=h, w=w)
        rate = _radius2depth_rate(d) if mode == 'r2d' else _depth2radius_rate(d)
        H, W = x.shape[-2], x.shape[-1]
        assert (H, W) == rate.shape, "rate map must broadcast (same as torch)"
        return _apply_rate_jit(x, rate)


# ----------------------------------- main -----------------------------------

if __name__ == "__main__":
    key = jax.random.PRNGKey(0)
    k1, k2, k3 = jax.random.split(key, 3)
    ce = CETransform()

    # e2c: equirect (B=1, C=4, H=16, W=32) -> 6 cube faces (6, 4, 8, 8)
    x_eq = jax.random.normal(k1, (1, 4, 16, 32), jnp.float32)
    y_e2c = ce(x_eq, 'e2c', s=2)

    # c2e: cube faces (6, 4, 8, 8) -> equirect (1, 4, 16, 8)   (w = h//2 as in module)
    x_cube = jax.random.normal(k2, (6, 4, 8, 8), jnp.float32)
    y_c2e = ce(x_cube, 'c2e', s=2)

    # r2d / d2r: element-wise rate maps on square (d x d) maps
    x_d = jax.random.normal(k3, (2, 4, 8, 8), jnp.float32)
    y_r2d = ce(x_d, 'r2d', s=1)   # s=1 so the (d,d) rate broadcasts (same constraint as torch)
    y_d2r = ce(x_d, 'd2r', s=2)

    # exercise the low-precision-output (VMEM scratch + flush) matmul path too
    y_e2c_bf16 = ce(x_eq.astype(jnp.bfloat16), 'e2c', s=2)

    jax.block_until_ready((y_e2c, y_c2e, y_r2d, y_d2r, y_e2c_bf16))

    assert y_e2c.shape == (6, 4, 8, 8)
    assert y_c2e.shape == (1, 4, 16, 8)
    assert y_r2d.shape == (2, 4, 8, 8)
    assert y_d2r.shape == (2, 4, 8, 8)
    assert y_e2c_bf16.shape == (6, 4, 8, 8)

    # --- e2c: matched reference (same bf16 M^T stream, f32 accumulation) ---
    MT6, _, _, meta_e = _e2c_setup(16, 32, 8)            # (6, 512, 128) bf16
    x2 = jnp.asarray(x_eq).reshape(4, 16 * 32).astype(MT6.dtype)
    ref = jnp.einsum('rk,fkn->frn', x2, MT6[:, :16 * 32, :64],
                     preferred_element_type=jnp.float32)
    ref = np.asarray(ref).reshape(6, 1, 4, 8, 8).transpose(1, 0, 2, 3, 4).reshape(6, 4, 8, 8)
    np.testing.assert_allclose(ref, np.asarray(y_e2c), rtol=2e-3, atol=2e-3)

    # --- e2c: full-precision semantic check (bf16 stream => looser tol) ---
    locs = _equirec2cube_grids(16, 32, 8)
    x2_np = np.asarray(x_eq).reshape(4, 16 * 32)
    ref32 = np.stack([x2_np @ _bilinear_matrix(g, 16, 32).T for g in locs], 0)
    ref32 = ref32.reshape(6, 1, 4, 8, 8).transpose(1, 0, 2, 3, 4).reshape(6, 4, 8, 8)
    np.testing.assert_allclose(ref32, np.asarray(y_e2c), rtol=3e-2, atol=3e-2)

    # --- c2e: matched reference ---
    MT3, _, _, meta_c = _c2e_setup(8, 16, 8)             # (6, 128, 128) bf16
    x3_np = np.asarray(x_cube).reshape(1, 6, 4, 64).transpose(1, 0, 2, 3).reshape(6, 4, 64)
    ref_c2e = jnp.einsum('frk,fkn->rn', jnp.asarray(x3_np).astype(MT3.dtype),
                         MT3[:, :64, :128], preferred_element_type=jnp.float32)
    ref_c2e = np.asarray(ref_c2e).reshape(1, 4, 16, 8)
    np.testing.assert_allclose(ref_c2e, np.asarray(y_c2e), rtol=2e-3, atol=2e-3)

    # --- d2r: element-wise kernel vs reference (exact f32 path) ---
    ref_d2r = np.asarray(x_d) * np.asarray(_depth2radius_rate(8))[None, None]
    np.testing.assert_allclose(ref_d2r, np.asarray(y_d2r), rtol=1e-5, atol=1e-5)

    assert np.all(np.isfinite(np.asarray(y_c2e)))
    assert np.all(np.isfinite(np.asarray(y_r2d)))
    assert np.all(np.isfinite(np.asarray(y_e2c_bf16).astype(np.float32)))

    print("KERNEL_OK")
</pallas_src>

<mosaic_0001>
module attributes {stable_mosaic.version = 11 : i64} {
  func.func @_e2c_kernel_f32(%arg0: i32, %arg1: i32, %arg2: i32, %arg3: memref<6xi32, #tpu.memory_space<smem>>, %arg4: memref<6xi32, #tpu.memory_space<smem>>, %arg5: memref<16x512xbf16, #tpu.memory_space<vmem>>, %arg6: memref<1x512x128xbf16, #tpu.memory_space<vmem>>, %arg7: memref<1x16x128xf32, #tpu.memory_space<vmem>>) attributes {dimension_semantics = [#tpu.dimension_semantics<parallel>, #tpu.dimension_semantics<parallel>, #tpu.dimension_semantics<arbitrary>], iteration_bounds = array<i64: 6, 1, 1>, scalar_prefetch = 2 : i64, scratch_operands = 0 : i64, tpu.core_type = #tpu.core_type<tc>, window_params = [{transform_indices = @transform_0, window_bounds = array<i64: 16, 512>}, {transform_indices = @transform_1, window_bounds = array<i64: 1, 512, 128>}, {transform_indices = @transform_2, window_bounds = array<i64: 1, 16, 128>}]} {
    %c0_i32 = arith.constant 0 : i32
    %0 = arith.cmpi eq, %arg2, %c0_i32 : i32
    %1 = arith.extui %0 : i1 to i32
    %c0_i32_0 = arith.constant 0 : i32
    %2 = arith.cmpi ne, %1, %c0_i32_0 : i32
    scf.if %2 {
      %cst = arith.constant 0.000000e+00 : f32
      %10 = vector.broadcast %cst : f32 to vector<16x128xf32>
      %c0 = arith.constant 0 : index
      %c0_2 = arith.constant 0 : index
      %c0_3 = arith.constant 0 : index
      %11 = vector.load %arg7[%c0, %c0_2, %c0_3] : memref<1x16x128xf32, #tpu.memory_space<vmem>>, vector<1x16x128xf32>
      %12 = vector.shape_cast %11 : vector<1x16x128xf32> to vector<16x128xf32>
      %13 = vector.shape_cast %10 : vector<16x128xf32> to vector<1x16x128xf32>
      tpu.vector_store %arg7[%c0, %c0_2, %c0_3], %13 {strides = array<i32>} : memref<1x16x128xf32, #tpu.memory_space<vmem>>, vector<1x16x128xf32>,
    } else {
    }
    %c1_i32 = arith.constant 1 : i32
    %3 = arith.muli %arg0, %c1_i32 : i32
    %4 = arith.addi %3, %arg1 : i32
    %5 = arith.index_cast %4 : i32 to index
    %6 = memref.load %arg4[%5] : memref<6xi32, #tpu.memory_space<smem>>
    %7 = arith.cmpi slt, %arg2, %6 : i32
    %8 = arith.extui %7 : i1 to i32
    %c0_i32_1 = arith.constant 0 : i32
    %9 = arith.cmpi ne, %8, %c0_i32_1 : i32
    scf.if %9 {
      %c0 = arith.constant 0 : index
      %c0_2 = arith.constant 0 : index
      %c0_3 = arith.constant 0 : index
      %10 = vector.load %arg7[%c0, %c0_2, %c0_3] : memref<1x16x128xf32, #tpu.memory_space<vmem>>, vector<1x16x128xf32>
      %11 = vector.shape_cast %10 : vector<1x16x128xf32> to vector<16x128xf32>
      %c0_4 = arith.constant 0 : index
      %c0_5 = arith.constant 0 : index
      %12 = vector.load %arg5[%c0_4, %c0_5] : memref<16x512xbf16, #tpu.memory_space<vmem>>, vector<16x512xbf16>
      %c0_6 = arith.constant 0 : index
      %c0_7 = arith.constant 0 : index
      %c0_8 = arith.constant 0 : index
      %13 = vector.load %arg6[%c0_6, %c0_7, %c0_8] : memref<1x512x128xbf16, #tpu.memory_space<vmem>>, vector<1x512x128xbf16>
      %14 = vector.shape_cast %13 : vector<1x512x128xbf16> to vector<512x128xbf16>
      %cst = arith.constant dense<0.000000e+00> : vector<16x128xf32>
      %15 = tpu.matmul %12, %14, %cst {dimension_numbers = #tpu.dot_dimension_numbers<[1], [0], [0], [1], [0, 0, 1, 1], [], []>} : vector<16x512xbf16>, vector<512x128xbf16>, vector<16x128xf32> -> vector<16x128xf32>
      %16 = arith.addf %11, %15 : vector<16x128xf32>
      %c0_9 = arith.constant 0 : index
      %c0_10 = arith.constant 0 : index
      %c0_11 = arith.constant 0 : index
      %17 = vector.load %arg7[%c0_9, %c0_10, %c0_11] : memref<1x16x128xf32, #tpu.memory_space<vmem>>, vector<1x16x128xf32>
      %18 = vector.shape_cast %17 : vector<1x16x128xf32> to vector<16x128xf32>
      %19 = vector.shape_cast %16 : vector<16x128xf32> to vector<1x16x128xf32>
      tpu.vector_store %arg7[%c0_9, %c0_10, %c0_11], %19 {strides = array<i32>} : memref<1x16x128xf32, #tpu.memory_space<vmem>>, vector<1x16x128xf32>,
    } else {
    }
    return
  }
  func.func @transform_0(%arg0: i32, %arg1: i32, %arg2: i32, %arg3: memref<6xi32, #tpu.memory_space<smem>>, %arg4: memref<6xi32, #tpu.memory_space<smem>>) -> (i32, i32) {
    %c1_i32 = arith.constant 1 : i32
    %0 = arith.muli %arg0, %c1_i32 : i32
    %1 = arith.addi %0, %arg1 : i32
    %c1_i32_0 = arith.constant 1 : i32
    %2 = arith.muli %1, %c1_i32_0 : i32
    %3 = arith.addi %2, %arg2 : i32
    %4 = arith.index_cast %3 : i32 to index
    %5 = memref.load %arg3[%4] : memref<6xi32, #tpu.memory_space<smem>>
    %c0_i32 = arith.constant 0 : i32
    %c0_i32_1 = arith.constant 0 : i32
    return %c0_i32, %5 : i32, i32
  }
  func.func @transform_1(%arg0: i32, %arg1: i32, %arg2: i32, %arg3: memref<6xi32, #tpu.memory_space<smem>>, %arg4: memref<6xi32, #tpu.memory_space<smem>>) -> (i32, i32, i32) {
    %c1_i32 = arith.constant 1 : i32
    %0 = arith.muli %arg0, %c1_i32 : i32
    %1 = arith.addi %0, %arg1 : i32
    %c1_i32_0 = arith.constant 1 : i32
    %2 = arith.muli %1, %c1_i32_0 : i32
    %3 = arith.addi %2, %arg2 : i32
    %4 = arith.index_cast %3 : i32 to index
    %5 = memref.load %arg3[%4] : memref<6xi32, #tpu.memory_space<smem>>
    %c0_i32 = arith.constant 0 : i32
    return %arg0, %5, %arg1 : i32, i32, i32
  }
  func.func @transform_2(%arg0: i32, %arg1: i32, %arg2: i32, %arg3: memref<6xi32, #tpu.memory_space<smem>>, %arg4: memref<6xi32, #tpu.memory_space<smem>>) -> (i32, i32, i32) {
    %c0_i32 = arith.constant 0 : i32
    %c0_i32_0 = arith.constant 0 : i32
    return %arg0, %c0_i32, %arg1 : i32, i32, i32
  }
}

</mosaic_0001>

<llo_original>
// kernel: _e2c_jit.1
$region0: #{_e2c_jit.1}
  #allocation0 [shape = 'u32[]', space=smem, size = 0x4, offset = 0x4, fixed_abs, tag = 'smem constant byte address 0x4 - core index']
  #allocation1 [shape = 'u32[144,128]{1,0:T(1,128)}', space=vmem, size = 0x12000, scoped, tag = 'internal scratch']
  #allocation2 [shape = 's32[1]{0}', space=sflag, size = 0x4, scoped, tag = 'scoped memory for _e2c_jit.1']
  #allocation3 [shape = 'u8[512]{0}', space=smem, size = 0x200, scoped, tag = 'prefetched SMEM operand 0']
  #allocation4 [shape = 'u8[512]{0}', space=smem, size = 0x200, scoped, tag = 'prefetched SMEM operand 1']
  %s0 = inlined_call_operand.hbm [shape: s32[6], index: 0, kind: input, shape index: {}]
  %s1 = inlined_call_operand.hbm [shape: s32[6], index: 1, kind: input, shape index: {}]
  %s2 = inlined_call_operand.hbm [shape: bf16[16,512], index: 2, kind: input, shape index: {}]
  %s3 = inlined_call_operand.hbm [shape: bf16[6,512,128], index: 3, kind: input, shape index: {}]
  %s4 = inlined_call_operand.hbm [shape: f32[6,16,128], index: 4, kind: output, shape index: {}]
  %s5 = sld [smem:[#allocation0]]
  $region57: #{_e2c_jit.1} parent=0
    _
  %s7 = ssub.s32 1, %s5
  %s8 = scalar_select 0, %s7, %s5
  %10 = dma.hbm_to_smem %s0, 16, [#allocation3], [#allocation2]
  %12 = dma.hbm_to_smem %s1, 16, [#allocation4], [#allocation2]
  %13 = dma.done [#allocation2], 32
  %14 = sfence
  $region1: #{_e2c_jit.1} parent=0
    #allocation5 [shape = 'u8[32768]{0}', space=vmem, size = 0x8000, scoped, tag = 'input window, operand 2']
    #allocation6 [shape = 's32[2]{0}', space=sflag, size = 0x8, scoped, tag = 'scoped memory for _e2c_jit.1']
    #allocation7 [shape = 's32[2]{0}', space=sflag, size = 0x8, scoped, tag = 'scoped memory for _e2c_jit.1']
    #allocation8 [shape = 'u8[262144]{0}', space=vmem, size = 0x40000, scoped, tag = 'input window, operand 3']
    #allocation9 [shape = 's32[2]{0}', space=sflag, size = 0x8, scoped, tag = 'scoped memory for _e2c_jit.1']
    #allocation10 [shape = 'u8[16384]{0}', space=vmem, size = 0x4000, scoped, tag = 'output window, operand 0']
    %15 = vsyncpa [#allocation6], 0
    %s16 = scalar_lea.sflag [#allocation6], 1
    %17 = vsyncpa %s16, 0
    %18 = vsyncpa [#allocation9], 0
    %s19 = scalar_lea.sflag [#allocation9], 1
    %20 = vsyncpa %s19, 0
    %21 = vsyncpa [#allocation7], 0
    %s22 = scalar_lea.sflag [#allocation7], 1
    %23 = vsyncpa %s22, 0
    loop: start=0, step=1, limit=8
    $region2: #{_e2c_jit.1} parent=1 // loop_pre_header
      _
    $region3: #{_e2c_jit.1} parent=1 // loop_header
      %s25 = sphi 0, %s29
      %p26 = scmp.ge.s32.totalorder %s25, 8
      %s32 = sphi 0, %s51
      %s33 = sphi 0, %s47
      %s34 = sphi 0, %s43
      %s35 = sphi 0, %s32
      %s36 = sphi 0, %s33
      %s37 = sphi 0, %s34
      %s38 = sphi 0, %s35
      %s39 = sphi 0, %s36
      %s40 = sphi 0, %s37
      %s60 = sphi 0, %s62
      %s63 = sphi 0, %s60
      %s64 = sphi 0, %s63
      %s80 = sphi 0, %s64
      %s96 = sphi 0, %s98
      %s99 = sphi 0, %s96
      %s100 = sphi 0, %s99
      %s116 = sphi 0, %s100
      %s124 = sphi 0, %s126
      %s127 = sphi 0, %s124
      %s128 = sphi 0, %s127
      %s144 = sphi 0, %s128
    $region4: #{_e2c_jit.1} parent=1 // loop_header_branch
      %28 = sbr.rel (%p26) target = $region8
    $region5: #{_e2c_jit.1} parent=1 // loop_body
      %s30 = ssub.s32 %s25, 1
      %s31 = ssub.s32 %s25, 2
      %s41 = sadd.s32 1, %s34
      %p42 = scmp.ge.s32.totalorder %s41, 1
      %s43 = scalar_select %p42, 0, %s41
      %s44 = sadd.s32 1, %s33
      %s45 = scalar_select %p42, %s44, %s33
      %p46 = scmp.ge.s32.totalorder %s45, 1
      %s47 = scalar_select %p46, 0, %s45
      %s48 = sadd.s32 1, %s32
      %s49 = scalar_select %p46, %s48, %s32
      %p50 = scmp.ge.s32.totalorder %s49, 6
      %s51 = scalar_select %p50, 0, %s49
      %s52 = sadd.s32 %s32, %s33
      %s53 = sadd.s32 %s52, %s34
      %s54 = sld [smem:[#allocation3 + %s53]]
      %s55 = sadd.s32 %s51, %s47
      %s56 = sadd.s32 %s55, %s43
      %s57 = sld [smem:[#allocation3 + %s56]]
      %s58 = ssub.s32 %s54, %s57
      %p59 = scmp.eq.s32.totalorder %s58, 0
      %s61 = sadd.s32 %s60, 1
      %s62 = scalar_select %p59, %s60, %s61
      %p65 = pneg %p59
      %p66 = scmp.eq.s32.totalorder %s25, 5
      %p67 = por %p65, %p66
      %p68 = scmp.ne.s32.totalorder %s60, %s63
      %p69 = scmp.eq.s32.totalorder %s25, 0
      %p70 = por %p68, %p69
      %p71 = scmp.ne.s32.totalorder %s60, %s63
      %p72 = scmp.eq.s32.totalorder %s30, 5
      %p73 = por %p71, %p72
      %p74 = scmp.ne.s32.totalorder %s63, %s64
      %p75 = scmp.eq.s32.totalorder %s30, 0
      %p76 = por %p74, %p75
      %p77 = scmp.ne.s32.totalorder %s63, %s64
      %p78 = scmp.eq.s32.totalorder %s31, 5
      %p79 = por %p77, %p78
      %p81 = scmp.ne.s32.totalorder %s64, %s80
      %p82 = scmp.eq.s32.totalorder %s31, 0
      %p83 = por %p81, %p82
      %s84 = sadd.s32 %s32, %s33
      %s85 = sadd.s32 %s84, %s34
      %s86 = sld [smem:[#allocation3 + %s85]]
      %s87 = sadd.s32 %s51, %s47
      %s88 = sadd.s32 %s87, %s43
      %s89 = sld [smem:[#allocation3 + %s88]]
      %s90 = ssub.s32 %s32, %s51
      %s91 = ssub.s32 %s86, %s89
      %s92 = sor.u32 %s90, %s91
      %s93 = ssub.s32 %s33, %s47
      %s94 = sor.u32 %s92, %s93
      %p95 = scmp.eq.s32.totalorder %s94, 0
      %s97 = sadd.s32 %s96, 1
      %s98 = scalar_select %p95, %s96, %s97
      %p101 = pneg %p95
      %p102 = scmp.eq.s32.totalorder %s25, 5
      %p103 = por %p101, %p102
      %p104 = scmp.ne.s32.totalorder %s96, %s99
      %p105 = scmp.eq.s32.totalorder %s25, 0
      %p106 = por %p104, %p105
      %p107 = scmp.ne.s32.totalorder %s96, %s99
      %p108 = scmp.eq.s32.totalorder %s30, 5
      %p109 = por %p107, %p108
      %p110 = scmp.ne.s32.totalorder %s99, %s100
      %p111 = scmp.eq.s32.totalorder %s30, 0
      %p112 = por %p110, %p111
      %p113 = scmp.ne.s32.totalorder %s99, %s100
      %p114 = scmp.eq.s32.totalorder %s31, 5
      %p115 = por %p113, %p114
      %p117 = scmp.ne.s32.totalorder %s100, %s116
      %p118 = scmp.eq.s32.totalorder %s31, 0
      %p119 = por %p117, %p118
      %s120 = ssub.s32 %s32, %s51
      %s121 = ssub.s32 %s33, %s47
      %s122 = sor.u32 %s120, %s121
      %p123 = scmp.eq.s32.totalorder %s122, 0
      %s125 = sadd.s32 %s124, 1
      %s126 = scalar_select %p123, %s124, %s125
      %p129 = pneg %p123
      %p130 = scmp.eq.s32.totalorder %s25, 5
      %p131 = por %p129, %p130
      %p132 = scmp.ne.s32.totalorder %s124, %s127
      %p133 = scmp.eq.s32.totalorder %s25, 0
      %p134 = por %p132, %p133
      %p135 = scmp.ne.s32.totalorder %s124, %s127
      %p136 = scmp.eq.s32.totalorder %s30, 5
      %p137 = por %p135, %p136
      %p138 = scmp.ne.s32.totalorder %s127, %s128
      %p139 = scmp.eq.s32.totalorder %s30, 0
      %p140 = por %p138, %p139
      %p141 = scmp.ne.s32.totalorder %s127, %s128
      %p142 = scmp.eq.s32.totalorder %s31, 5
      %p143 = por %p141, %p142
      %p145 = scmp.ne.s32.totalorder %s128, %s144
      %p146 = scmp.eq.s32.totalorder %s31, 0
      %p147 = por %p145, %p146
      %p148 = scmp.le.s32.totalorder 1, %s25
      %p149 = scmp.lt.s32.totalorder %s25, 7
      %p150 = pnand %p148, %p149
      %p151 = pneg %p150
      // Predicated region
      $region9: #{_e2c_jit.1} parent=5 // pred_check
        _
      $region10: #{_e2c_jit.1} parent=5 // pred_check_branch
        %153 = sbr.rel (%p150) target = $region12
      $region11: #{_e2c_jit.1} parent=5 // pred_region
        %s154 = ssub.s32 %s25, 1
      $region12: #{_e2c_jit.1} parent=5 // pred_fallthru
        _
      %p155 = scmp.lt.s32.totalorder %s25, 6
      // Predicated region
      $region13: #{_e2c_jit.1} parent=5 // pred_check
        %p156 = pneg %p155
      $region14: #{_e2c_jit.1} parent=5 // pred_check_branch
        %158 = sbr.rel (%p156) target = $region16
      $region15: #{_e2c_jit.1} parent=5 // pred_region
        // Predicated region
        $region17: #{_e2c_jit.1} parent=15 // pred_check
          %p159 = pneg %p70
        $region18: #{_e2c_jit.1} parent=15 // pred_check_branch
          %161 = sbr.rel (%p159) target = $region20
        $region19: #{_e2c_jit.1} parent=15 // pred_region
          %s162 = sand.u32 %s60, 1
          %s163 = scalar_lea.sflag [#allocation6], %s162
          %s164 = sand.u32 %s60, 1
          %s165 = smul.addr %s164, 32
          %s166 = scalar_lea.vmem [#allocation5], %s165
          %s167 = sadd.s32 %s32, %s33
          %s168 = sadd.s32 %s167, %s34
          %s169 = sld [smem:[#allocation3 + %s168]]
          %s170 = smul.u32 4, %s169
          %s172 = ssub.s32 512, 512
          %173 = vsyncadd %s163, %s172
          %s174 = smul.addr %s170, 64
          %s175 = scalar_lea.hbm %s2, %s174
          %s176 = sshll.u32 %s166, 4
          %s177 = int_to_ptr.vmem [resolvable:$true] %s176
          %182 = dma.hbm_to_vmem [thread:$0]  %s175, 512, %s177, %s163, 256, 256, 16
        $region20: #{_e2c_jit.1} parent=15 // pred_fallthru
          _
        // Predicated region
        $region21: #{_e2c_jit.1} parent=15 // pred_check
          %p183 = pneg %p106
        $region22: #{_e2c_jit.1} parent=15 // pred_check_branch
          %185 = sbr.rel (%p183) target = $region24
        $region23: #{_e2c_jit.1} parent=15 // pred_region
          %s186 = sand.u32 %s96, 1
          %s187 = scalar_lea.sflag [#allocation9], %s186
          %s188 = sand.u32 %s96, 1
          %s189 = smul.addr %s188, 256
          %s190 = scalar_lea.vmem [#allocation8], %s189
          %s191 = sadd.s32 %s32, %s33
          %s192 = sadd.s32 %s191, %s34
          %s193 = sld [smem:[#allocation3 + %s192]]
          %s194 = smul.u32 64, %s193
          %s196 = ssub.s32 4096, 4096
          %197 = vsyncadd %s187, %s196
          %s198 = sadd.s32 %s33, %s194
          %s199 = smul.addr %s32, 64
          %s200 = sadd.s32 %s198, %s199
          %s201 = smul.addr %s200, 64
          %s202 = scalar_lea.hbm %s3, %s201
          %s203 = sshll.u32 %s190, 4
          %s204 = int_to_ptr.vmem [resolvable:$true] %s203
          %209 = dma.hbm_to_vmem [thread:$0]  %s202, 4096, %s204, %s187, 64, 64, 4
        $region24: #{_e2c_jit.1} parent=15 // pred_fallthru
          _
      $region16: #{_e2c_jit.1} parent=5 // pred_fallthru
        _
      %p210 = scmp.le.s32.totalorder 1, %s25
      %p211 = scmp.lt.s32.totalorder %s25, 7
      %p212 = pnand %p210, %p211
      %p213 = pneg %p212
      // Predicated region
      $region25: #{_e2c_jit.1} parent=5 // pred_check
        _
      $region26: #{_e2c_jit.1} parent=5 // pred_check_branch
        %215 = sbr.rel (%p212) target = $region28
      $region27: #{_e2c_jit.1} parent=5 // pred_region
        %s216 = ssub.s32 %s25, 1
        %s217 = sand.u32 %s63, 1
        %s218 = scalar_lea.sflag [#allocation6], %s217
        %s219 = sand.u32 %s63, 1
        %s220 = smul.addr %s219, 32
        %s221 = scalar_lea.vmem [#allocation5], %s220
        // Predicated region
        $region29: #{_e2c_jit.1} parent=27 // pred_check
          %p222 = pneg %p76
        $region30: #{_e2c_jit.1} parent=27 // pred_check_branch
          %224 = sbr.rel (%p222) target = $region32
        $region31: #{_e2c_jit.1} parent=27 // pred_region
          %225 = dma.done %s218, 512
        $region32: #{_e2c_jit.1} parent=27 // pred_fallthru
          _
        %s226 = sand.u32 %s99, 1
        %s227 = scalar_lea.sflag [#allocation9], %s226
        %s228 = sand.u32 %s99, 1
        %s229 = smul.addr %s228, 256
        %s230 = scalar_lea.vmem [#allocation8], %s229
        // Predicated region
        $region33: #{_e2c_jit.1} parent=27 // pred_check
          %p231 = pneg %p112
        $region34: #{_e2c_jit.1} parent=27 // pred_check_branch
          %233 = sbr.rel (%p231) target = $region36
        $region35: #{_e2c_jit.1} parent=27 // pred_region
          %234 = dma.done %s227, 4096
        $region36: #{_e2c_jit.1} parent=27 // pred_fallthru
          _
        %s235 = sand.u32 %s63, 1
        %s236 = scalar_lea.sflag [#allocation6], %s235
        %s237 = sand.u32 %s63, 1
        %s238 = smul.addr %s237, 32
        %s239 = scalar_lea.vmem [#allocation5], %s238
        %p240 = pneg %p76
        %p241 = pneg %p73
        %s242 = sand.u32 %s99, 1
        %s243 = scalar_lea.sflag [#allocation9], %s242
        %s244 = sand.u32 %s99, 1
        %s245 = smul.addr %s244, 256
        %s246 = scalar_lea.vmem [#allocation8], %s245
        %p247 = pneg %p112
        %p248 = pneg %p109
        %p249 = pneg %p140
        %p250 = pneg %p137
        %s251 = sand.u32 %s127, 1
        %s252 = scalar_lea.sflag [#allocation7], %s251
        %s253 = sand.u32 %s127, 1
        %s254 = smul.addr %s253, 16
        %s255 = scalar_lea.vmem [#allocation10], %s254
        %s256 = sadd.s32 %s35, %s36
        %s257 = sadd.s32 %s256, %s37
        %s258 = sld [smem:[#allocation3 + %s257]]
        %s259 = smul.u32 4, %s258
        %s260 = sadd.s32 %s35, %s36
        %s261 = sadd.s32 %s260, %s37
        %s262 = sld [smem:[#allocation3 + %s261]]
        %s263 = smul.u32 64, %s262
        %p265 = scmp.eq.s32.totalorder %s37, 0
        // Predicated region
        $region37: #{_e2c_jit.1} parent=27 // pred_check
          %p266 = pneg %p265
        $region38: #{_e2c_jit.1} parent=27 // pred_check_branch
          %268 = sbr.rel (%p266) target = $region40
        $region39: #{_e2c_jit.1} parent=27 // pred_region
          %269 = vst [vmem:[%s255] sm:$0xff] 0.0
          %270 = vst [vmem:[%s255 + $0x8] sm:$0xff] 0.0
        $region40: #{_e2c_jit.1} parent=27 // pred_fallthru
          _
        %s271 = sadd.s32 %s35, %s36
        %s272 = sld [smem:[#allocation4 + %s271]]
        %p273 = scmp.lt.s32.totalorder %s37, %s272
        // Predicated region
        $region41: #{_e2c_jit.1} parent=27 // pred_check
          %p274 = pneg %p273
        $region42: #{_e2c_jit.1} parent=27 // pred_check_branch
          %276 = sbr.rel (%p274) target = $region44
        $region43: #{_e2c_jit.1} parent=27 // pred_region
          %v277 = vld [vmem:[%s255] sm:$0xff]
          %v278 = vld [vmem:[%s255 + $0x8] sm:$0xff]
          %v279 = vld [vmem:[%s221] sm:$0xff]
          %v280 = vld [vmem:[%s221 + $0x8] sm:$0xff]
          %v281 = vld [vmem:[%s221 + $0x10] sm:$0xff]
          %v282 = vld [vmem:[%s221 + $0x18] sm:$0xff]
          %v283 = vld [vmem:[%s230] sm:$0xf]
          %v284 = vld [vmem:[%s230 + $0x4] sm:$0xf]
          %v285 = vld [vmem:[%s230 + $0x8] sm:$0xf]
          %v286 = vld [vmem:[%s230 + $0xc] sm:$0xf]
          %v287 = vld [vmem:[%s230 + $0x10] sm:$0xf]
          %v288 = vld [vmem:[%s230 + $0x14] sm:$0xf]
          %v289 = vld [vmem:[%s230 + $0x18] sm:$0xf]
          %v290 = vld [vmem:[%s230 + $0x1c] sm:$0xf]
          %v291 = vld [vmem:[%s230 + $0x20] sm:$0xf]
          %v292 = vld [vmem:[%s230 + $0x24] sm:$0xf]
          %v293 = vld [vmem:[%s230 + $0x28] sm:$0xf]
          %v294 = vld [vmem:[%s230 + $0x2c] sm:$0xf]
          %v295 = vld [vmem:[%s230 + $0x30] sm:$0xf]
          %v296 = vld [vmem:[%s230 + $0x34] sm:$0xf]
          %v297 = vld [vmem:[%s230 + $0x38] sm:$0xf]
          %v298 = vld [vmem:[%s230 + $0x3c] sm:$0xf]
          %v299 = vld [vmem:[%s230 + $0x40] sm:$0xf]
          %v300 = vld [vmem:[%s230 + $0x44] sm:$0xf]
          %v301 = vld [vmem:[%s230 + $0x48] sm:$0xf]
          %v302 = vld [vmem:[%s230 + $0x4c] sm:$0xf]
          %v303 = vld [vmem:[%s230 + $0x50] sm:$0xf]
          %v304 = vld [vmem:[%s230 + $0x54] sm:$0xf]
          %v305 = vld [vmem:[%s230 + $0x58] sm:$0xf]
          %v306 = vld [vmem:[%s230 + $0x5c] sm:$0xf]
          %v307 = vld [vmem:[%s230 + $0x60] sm:$0xf]
          %v308 = vld [vmem:[%s230 + $0x64] sm:$0xf]
          %v309 = vld [vmem:[%s230 + $0x68] sm:$0xf]
          %v310 = vld [vmem:[%s230 + $0x6c] sm:$0xf]
          %v311 = vld [vmem:[%s230 + $0x70] sm:$0xf]
          %v312 = vld [vmem:[%s230 + $0x74] sm:$0xf]
          %v313 = vld [vmem:[%s230 + $0x78] sm:$0xf]
          %v314 = vld [vmem:[%s230 + $0x7c] sm:$0xf]
          %v315 = vld [vmem:[%s230 + $0x80] sm:$0xf]
          %v316 = vld [vmem:[%s230 + $0x84] sm:$0xf]
          %v317 = vld [vmem:[%s230 + $0x88] sm:$0xf]
          %v318 = vld [vmem:[%s230 + $0x8c] sm:$0xf]
          %v319 = vld [vmem:[%s230 + $0x90] sm:$0xf]
          %v320 = vld [vmem:[%s230 + $0x94] sm:$0xf]
          %v321 = vld [vmem:[%s230 + $0x98] sm:$0xf]
          %v322 = vld [vmem:[%s230 + $0x9c] sm:$0xf]
          %v323 = vld [vmem:[%s230 + $0xa0] sm:$0xf]
          %v324 = vld [vmem:[%s230 + $0xa4] sm:$0xf]
          %v325 = vld [vmem:[%s230 + $0xa8] sm:$0xf]
          %v326 = vld [vmem:[%s230 + $0xac] sm:$0xf]
          %v327 = vld [vmem:[%s230 + $0xb0] sm:$0xf]
          %v328 = vld [vmem:[%s230 + $0xb4] sm:$0xf]
          %v329 = vld [vmem:[%s230 + $0xb8] sm:$0xf]
          %v330 = vld [vmem:[%s230 + $0xbc] sm:$0xf]
          %v331 = vld [vmem:[%s230 + $0xc0] sm:$0xf]
          %v332 = vld [vmem:[%s230 + $0xc4] sm:$0xf]
          %v333 = vld [vmem:[%s230 + $0xc8] sm:$0xf]
          %v334 = vld [vmem:[%s230 + $0xcc] sm:$0xf]
          %v335 = vld [vmem:[%s230 + $0xd0] sm:$0xf]
          %v336 = vld [vmem:[%s230 + $0xd4] sm:$0xf]
          %v337 = vld [vmem:[%s230 + $0xd8] sm:$0xf]
          %v338 = vld [vmem:[%s230 + $0xdc] sm:$0xf]
          %v339 = vld [vmem:[%s230 + $0xe0] sm:$0xf]
          %v340 = vld [vmem:[%s230 + $0xe4] sm:$0xf]
          %v341 = vld [vmem:[%s230 + $0xe8] sm:$0xf]
          %v342 = vld [vmem:[%s230 + $0xec] sm:$0xf]
          %v343 = vld [vmem:[%s230 + $0xf0] sm:$0xf]
          %v344 = vld [vmem:[%s230 + $0xf4] sm:$0xf]
          %v345 = vld [vmem:[%s230 + $0xf8] sm:$0xf]
          %v346 = vld [vmem:[%s230 + $0xfc] sm:$0xf]
          %v351 = vunpack.c.l.b16 %v279
          %v352 = vunpack.c.h.b16 %v279
          %v353 = vunpack.c.l.b16 %v280
          %v354 = vunpack.c.h.b16 %v280
          %v355 = vunpack.c.l.b16 %v281
          %v356 = vunpack.c.h.b16 %v281
          %v357 = vunpack.c.l.b16 %v282
          %v358 = vunpack.c.h.b16 %v282
          %v359 = vpack.c.b16 %v355, %v351
          %v360 = vpack.c.b16 %v356, %v352
          %v361 = vpack.c.b16 %v357, %v353
          %v362 = vpack.c.b16 %v358, %v354
          %v431 = vunpack.c.l.b16 %v283
          %v432 = vunpack.c.l.b16 %v284
          %v433 = vunpack.c.l.b16 %v285
          %v434 = vunpack.c.l.b16 %v286
          %v435 = vunpack.c.l.b16 %v287
          %v436 = vunpack.c.l.b16 %v288
          %v437 = vunpack.c.l.b16 %v289
          %v438 = vunpack.c.l.b16 %v290
          %v439 = vunpack.c.l.b16 %v291
          %v440 = vunpack.c.l.b16 %v292
          %v441 = vunpack.c.l.b16 %v293
          %v442 = vunpack.c.l.b16 %v294
          %v443 = vunpack.c.l.b16 %v295
          %v444 = vunpack.c.l.b16 %v296
          %v445 = vunpack.c.l.b16 %v297
          %v446 = vunpack.c.l.b16 %v298
          %v447 = vunpack.c.l.b16 %v299
          %v448 = vunpack.c.l.b16 %v300
          %v449 = vunpack.c.l.b16 %v301
          %v450 = vunpack.c.l.b16 %v302
          %v451 = vunpack.c.l.b16 %v303
          %v452 = vunpack.c.l.b16 %v304
          %v453 = vunpack.c.l.b16 %v305
          %v454 = vunpack.c.l.b16 %v306
          %v455 = vunpack.c.l.b16 %v307
          %v456 = vunpack.c.l.b16 %v308
          %v457 = vunpack.c.l.b16 %v309
          %v458 = vunpack.c.l.b16 %v310
          %v459 = vunpack.c.l.b16 %v311
          %v460 = vunpack.c.l.b16 %v312
          %v461 = vunpack.c.l.b16 %v313
          %v462 = vunpack.c.l.b16 %v314
          %v463 = vunpack.c.l.b16 %v315
          %v464 = vunpack.c.l.b16 %v316
          %v465 = vunpack.c.l.b16 %v317
          %v466 = vunpack.c.l.b16 %v318
          %v467 = vunpack.c.l.b16 %v319
          %v468 = vunpack.c.l.b16 %v320
          %v469 = vunpack.c.l.b16 %v321
          %v470 = vunpack.c.l.b16 %v322
          %v471 = vunpack.c.l.b16 %v323
          %v472 = vunpack.c.l.b16 %v324
          %v473 = vunpack.c.l.b16 %v325
          %v474 = vunpack.c.l.b16 %v326
          %v475 = vunpack.c.l.b16 %v327
          %v476 = vunpack.c.l.b16 %v328
          %v477 = vunpack.c.l.b16 %v329
          %v478 = vunpack.c.l.b16 %v330
          %v479 = vunpack.c.l.b16 %v331
          %v480 = vunpack.c.l.b16 %v332
          %v481 = vunpack.c.l.b16 %v333
          %v482 = vunpack.c.l.b16 %v334
          %v483 = vunpack.c.l.b16 %v335
          %v484 = vunpack.c.l.b16 %v336
          %v485 = vunpack.c.l.b16 %v337
          %v486 = vunpack.c.l.b16 %v338
          %v487 = vunpack.c.l.b16 %v339
          %v488 = vunpack.c.l.b16 %v340
          %v489 = vunpack.c.l.b16 %v341
          %v490 = vunpack.c.l.b16 %v342
          %v491 = vunpack.c.l.b16 %v343
          %v492 = vunpack.c.l.b16 %v344
          %v493 = vunpack.c.l.b16 %v345
          %v494 = vunpack.c.l.b16 %v346
          %v495 = vpack.c.b16 %v432, %v431
          %v496 = vpack.c.b16 %v434, %v433
          %v497 = vpack.c.b16 %v436, %v435
          %v498 = vpack.c.b16 %v438, %v437
          %v499 = vpack.c.b16 %v440, %v439
          %v500 = vpack.c.b16 %v442, %v441
          %v501 = vpack.c.b16 %v444, %v443
          %v502 = vpack.c.b16 %v446, %v445
          %v503 = vpack.c.b16 %v448, %v447
          %v504 = vpack.c.b16 %v450, %v449
          %v505 = vpack.c.b16 %v452, %v451
          %v506 = vpack.c.b16 %v454, %v453
          %v507 = vpack.c.b16 %v456, %v455
          %v508 = vpack.c.b16 %v458, %v457
          %v509 = vpack.c.b16 %v460, %v459
          %v510 = vpack.c.b16 %v462, %v461
          %v511 = vpack.c.b16 %v464, %v463
          %v512 = vpack.c.b16 %v466, %v465
          %v513 = vpack.c.b16 %v468, %v467
          %v514 = vpack.c.b16 %v470, %v469
          %v515 = vpack.c.b16 %v472, %v471
          %v516 = vpack.c.b16 %v474, %v473
          %v517 = vpack.c.b16 %v476, %v475
          %v518 = vpack.c.b16 %v478, %v477
          %v519 = vpack.c.b16 %v480, %v479
          %v520 = vpack.c.b16 %v482, %v481
          %v521 = vpack.c.b16 %v484, %v483
          %v522 = vpack.c.b16 %v486, %v485
          %v523 = vpack.c.b16 %v488, %v487
          %v524 = vpack.c.b16 %v490, %v489
          %v525 = vpack.c.b16 %v492, %v491
          %v526 = vpack.c.b16 %v494, %v493
          %559 = vmatprep.subr.bf16.mxu0 0
          %560 = vmatpush1.bf16.msra.mxu0 %v495
          %561 = vmatprep.subr.bf16.mxu0 0
          %562 = vmatpush1.bf16.msra.mxu0 %v496
          %563 = vmatprep.subr.bf16.mxu0 0
          %564 = vmatpush1.bf16.msra.mxu0 %v497
          %565 = vmatprep.subr.bf16.mxu0 0
          %566 = vmatpush1.bf16.msra.mxu0 %v498
          %567 = vmatprep.subr.bf16.mxu0 0
          %568 = vmatpush1.bf16.msra.mxu0 %v499
          %569 = vmatprep.subr.bf16.mxu0 0
          %570 = vmatpush1.bf16.msra.mxu0 %v500
          %571 = vmatprep.subr.bf16.mxu0 0
          %572 = vmatpush1.bf16.msra.mxu0 %v501
          %573 = vmatprep.subr.bf16.mxu0 0
          %574 = vmatpush1.bf16.msra.mxu0 %v502
          %575 = vmatprep.subr.bf16.mxu0 0
          %576 = vmatpush1.bf16.msra.mxu0 %v503
          %577 = vmatprep.subr.bf16.mxu0 0
          %578 = vmatpush1.bf16.msra.mxu0 %v504
          %579 = vmatprep.subr.bf16.mxu0 0
          %580 = vmatpush1.bf16.msra.mxu0 %v505
          %581 = vmatprep.subr.bf16.mxu0 0
          %582 = vmatpush1.bf16.msra.mxu0 %v506
          %583 = vmatprep.subr.bf16.mxu0 0
          %584 = vmatpush1.bf16.msra.mxu0 %v507
          %585 = vmatprep.subr.bf16.mxu0 0
          %586 = vmatpush1.bf16.msra.mxu0 %v508
          %587 = vmatprep.subr.bf16.mxu0 0
          %588 = vmatpush1.bf16.msra.mxu0 %v509
          %589 = vmatprep.subr.bf16.mxu0 0
          %590 = vmatpush1.bf16.msra.mxu0 %v510
          %591 = vmatprep.mubr.bf16.mxu0 %v360
          %592 = vmatmul.mubr.bf16.gmra.mrb[0].mxu0 %v359
          %v593 = vpop.f32.mrb[0].mxu0
          %v594 = vadd.f32 0.0, %v593
          %v595 = vpop.f32.mrb[0].mxu0
          %v596 = vpop.f32.mrb[0].mxu0
          %v597 = vadd.f32 0.0, %v596
          %v598 = vpop.f32.mrb[0].mxu0
          %599 = vdwg.mxu0
          %600 = vmatprep.subr.bf16.mxu0 0
          %601 = vmatpush1.bf16.msra.mxu0 %v511
          %602 = vmatprep.subr.bf16.mxu0 0
          %603 = vmatpush1.bf16.msra.mxu0 %v512
          %604 = vmatprep.subr.bf16.mxu0 0
          %605 = vmatpush1.bf16.msra.mxu0 %v513
          %606 = vmatprep.subr.bf16.mxu0 0
          %607 = vmatpush1.bf16.msra.mxu0 %v514
          %608 = vmatprep.subr.bf16.mxu0 0
          %609 = vmatpush1.bf16.msra.mxu0 %v515
          %610 = vmatprep.subr.bf16.mxu0 0
          %611 = vmatpush1.bf16.msra.mxu0 %v516
          %612 = vmatprep.subr.bf16.mxu0 0
          %613 = vmatpush1.bf16.msra.mxu0 %v517
          %614 = vmatprep.subr.bf16.mxu0 0
          %615 = vmatpush1.bf16.msra.mxu0 %v518
          %616 = vmatprep.subr.bf16.mxu0 0
          %617 = vmatpush1.bf16.msra.mxu0 %v519
          %618 = vmatprep.subr.bf16.mxu0 0
          %619 = vmatpush1.bf16.msra.mxu0 %v520
          %620 = vmatprep.subr.bf16.mxu0 0
          %621 = vmatpush1.bf16.msra.mxu0 %v521
          %622 = vmatprep.subr.bf16.mxu0 0
          %623 = vmatpush1.bf16.msra.mxu0 %v522
          %624 = vmatprep.subr.bf16.mxu0 0
          %625 = vmatpush1.bf16.msra.mxu0 %v523
          %626 = vmatprep.subr.bf16.mxu0 0
          %627 = vmatpush1.bf16.msra.mxu0 %v524
          %628 = vmatprep.subr.bf16.mxu0 0
          %629 = vmatpush1.bf16.msra.mxu0 %v525
          %630 = vmatprep.subr.bf16.mxu0 0
          %631 = vmatpush1.bf16.msra.mxu0 %v526
          %632 = vmatprep.mubr.bf16.mxu0 %v362
          %633 = vmatmul.mubr.bf16.gmra.mrb[0].mxu0 %v361
          %v634 = vpop.f32.mrb[0].mxu0
          %v635 = vadd.f32 %v594, %v634
          %v636 = vpop.f32.mrb[0].mxu0
          %v637 = vpop.f32.mrb[0].mxu0
          %v638 = vadd.f32 %v597, %v637
          %v639 = vpop.f32.mrb[0].mxu0
          %640 = vdwg.mxu0
          %v641 = vadd.f32 %v277, %v635
          %v642 = vadd.f32 %v278, %v638
          %643 = vst [vmem:[%s255] sm:$0xff] %v641
          %644 = vst [vmem:[%s255 + $0x8] sm:$0xff] %v642
        $region44: #{_e2c_jit.1} parent=27 // pred_fallthru
          _
        %s645 = sand.u32 %s127, 1
        %s646 = scalar_lea.sflag [#allocation7], %s645
        %s647 = sand.u32 %s127, 1
        %s648 = smul.addr %s647, 16
        %s649 = scalar_lea.vmem [#allocation10], %s648
        // Predicated region
        $region45: #{_e2c_jit.1} parent=27 // pred_check
          %p650 = pneg %p137
        $region46: #{_e2c_jit.1} parent=27 // pred_check_branch
          %652 = sbr.rel (%p650) target = $region48
        $region47: #{_e2c_jit.1} parent=27 // pred_region
          %s654 = ssub.s32 256, 256
          %655 = vsyncadd %s646, %s654
          %s656 = smul.addr %s35, 2
          %s657 = sadd.s32 %s36, %s656
          %s658 = smul.addr %s657, 128
          %s659 = scalar_lea.hbm %s4, %s658
          %s660 = sshll.u32 %s649, 4
          %s661 = int_to_ptr.vmem [resolvable:$true] %s660
          %666 = dma.vmem_to_hbm [thread:$0]  %s661, 256, %s659, %s646, 128, 128, 8
        $region48: #{_e2c_jit.1} parent=27 // pred_fallthru
          _
      $region28: #{_e2c_jit.1} parent=5 // pred_fallthru
        _
      %p667 = scmp.le.s32.totalorder 2, %s25
      // Predicated region
      $region49: #{_e2c_jit.1} parent=5 // pred_check
        %p668 = pneg %p667
      $region50: #{_e2c_jit.1} parent=5 // pred_check_branch
        %670 = sbr.rel (%p668) target = $region52
      $region51: #{_e2c_jit.1} parent=5 // pred_region
        %s671 = ssub.s32 %s25, 2
        // Predicated region
        $region53: #{_e2c_jit.1} parent=51 // pred_check
          %p672 = pneg %p143
        $region54: #{_e2c_jit.1} parent=51 // pred_check_branch
          %674 = sbr.rel (%p672) target = $region56
        $region55: #{_e2c_jit.1} parent=51 // pred_region
          %s675 = sand.u32 %s128, 1
          %s676 = scalar_lea.sflag [#allocation7], %s675
          %s677 = sand.u32 %s128, 1
          %s678 = smul.addr %s677, 16
          %s679 = scalar_lea.vmem [#allocation10], %s678
          %680 = dma.done %s676, 256
        $region56: #{_e2c_jit.1} parent=51 // pred_fallthru
          _
      $region52: #{_e2c_jit.1} parent=5 // pred_fallthru
        _
    $region6: #{_e2c_jit.1} parent=1 // loop_footer
      %s29 = sadd.s32 1, %s25
    $region7: #{_e2c_jit.1} parent=1 // loop_footer_branch
      %24 = sbr.rel target = $region3
    $region8: #{_e2c_jit.1} parent=1 // loop_exit
      _
    %681 = vsyncpa [#allocation6], 1
    %s682 = scalar_lea.sflag [#allocation6], 1
    %683 = vsyncpa %s682, 1
    %684 = vsyncpa [#allocation9], 1
    %s685 = scalar_lea.sflag [#allocation9], 1
    %686 = vsyncpa %s685, 1
    %687 = vsyncpa [#allocation7], 1
    %s688 = scalar_lea.sflag [#allocation7], 1
    %689 = vsyncpa %s688, 1

</llo_original>
